<compile_context>
chip_gen: v7x
topology: tpu7x:2x2x1
jax: 0.10.0
libtpu: 0.0.40
codegen_flags: <defaults>
</compile_context>

<pallas_src>
import jax
import jax.numpy as jnp
from jax.experimental import pallas as pl
from jax.experimental.pallas import tpu as pltpu


def linear_kernel(x_ref, w_ref, b_ref, o_ref):
    # x_ref: (B, IN)   f32
    # w_ref: (IN, OUT) f32  (weight already transposed in the wrapper)
    # b_ref: (1, OUT)  f32
    # o_ref: (B, OUT)  f32
    x = x_ref[...]
    w = w_ref[...]
    b = b_ref[...]
    in_features = w.shape[0]

    # Start from the bias, replicated over the batch (sublane broadcast,
    # folded straight into the VPU FMAs below).
    y = jnp.broadcast_to(b, o_ref.shape)

    # Tiny static contraction (IN = 2): pure VPU broadcast multiply-adds.
    # No MXU push, no transpose.  See scaling notes above for the
    # dot_general path if IN/OUT ever grow.
    for k in range(in_features):
        y = y + x[:, k:k + 1] * w[k:k + 1, :]

    o_ref[...] = y.astype(o_ref.dtype)


@jax.jit
def linear_pallas(x, weight, bias):
    """x: (B, IN) f32, weight: (OUT, IN) f32 (PyTorch layout), bias: (OUT,) f32.

    Returns y = x @ weight.T + bias with shape (B, OUT).
    """
    B, IN = x.shape
    OUT = weight.shape[0]

    # Layout-only ops; fused by jit (no standalone HBM round-trip).
    w_t = weight.T               # (IN, OUT)
    b2 = bias.reshape(1, OUT)    # (1, OUT)

    cost = pl.CostEstimate(
        flops=2 * B * IN * OUT + B * OUT,
        transcendentals=0,
        bytes_accessed=4 * (B * IN + IN * OUT + OUT + B * OUT),
    )

    return pl.pallas_call(
        linear_kernel,
        out_shape=jax.ShapeDtypeStruct((B, OUT), x.dtype),
        in_specs=[
            pl.BlockSpec(memory_space=pltpu.MemorySpace.VMEM),
            pl.BlockSpec(memory_space=pltpu.MemorySpace.VMEM),
            pl.BlockSpec(memory_space=pltpu.MemorySpace.VMEM),
        ],
        out_specs=pl.BlockSpec(memory_space=pltpu.MemorySpace.VMEM),
        cost_estimate=cost,
    )(x, w_t, b2)


if __name__ == "__main__":
    key = jax.random.PRNGKey(0)
    kx, kw, kb = jax.random.split(key, 3)

    B, IN, OUT = 8, 2, 2
    x = jax.random.normal(kx, (B, IN), dtype=jnp.float32)

    # Deterministic parameter init (mimics PyTorch Linear's
    # uniform(-1/sqrt(in), 1/sqrt(in))).
    bound = 1.0 / (IN ** 0.5)
    weight = jax.random.uniform(kw, (OUT, IN), minval=-bound, maxval=bound,
                                dtype=jnp.float32)
    bias = jax.random.uniform(kb, (OUT,), minval=-bound, maxval=bound,
                              dtype=jnp.float32)

    y = linear_pallas(x, weight, bias)
    jax.block_until_ready(y)

    # Reference check in plain JAX.
    y_ref = x @ weight.T + bias
    assert y.shape == (B, OUT)
    assert jnp.allclose(y, y_ref, atol=1e-5, rtol=1e-5)

    print("KERNEL_OK")
</pallas_src>

<mosaic_0001>
module attributes {stable_mosaic.version = 11 : i64} {
  func.func @linear_kernel(%arg0: memref<8x2xf32, #tpu.memory_space<vmem>>, %arg1: memref<2x2xf32, #tpu.memory_space<vmem>>, %arg2: memref<1x2xf32, #tpu.memory_space<vmem>>, %arg3: memref<8x2xf32, #tpu.memory_space<vmem>>) attributes {dimension_semantics = [], scalar_prefetch = 0 : i64, scratch_operands = 0 : i64, tpu.core_type = #tpu.core_type<tc>} {
    %c0 = arith.constant 0 : index
    %c0_0 = arith.constant 0 : index
    %0 = vector.load %arg0[%c0, %c0_0] : memref<8x2xf32, #tpu.memory_space<vmem>>, vector<8x2xf32>
    %c0_1 = arith.constant 0 : index
    %c0_2 = arith.constant 0 : index
    %1 = vector.load %arg1[%c0_1, %c0_2] : memref<2x2xf32, #tpu.memory_space<vmem>>, vector<2x2xf32>
    %c0_3 = arith.constant 0 : index
    %c0_4 = arith.constant 0 : index
    %2 = vector.load %arg2[%c0_3, %c0_4] : memref<1x2xf32, #tpu.memory_space<vmem>>, vector<1x2xf32>
    %3 = vector.shape_cast %2 : vector<1x2xf32> to vector<1x2xf32>
    %4 = vector.broadcast %3 : vector<1x2xf32> to vector<8x2xf32>
    %5 = vector.extract_strided_slice %0 {offsets = [0, 0], sizes = [8, 1], strides = [1, 1]} : vector<8x2xf32> to vector<8x1xf32>
    %6 = vector.extract_strided_slice %1 {offsets = [0, 0], sizes = [1, 2], strides = [1, 1]} : vector<2x2xf32> to vector<1x2xf32>
    %7 = vector.broadcast %5 : vector<8x1xf32> to vector<8x2xf32>
    %8 = vector.broadcast %6 : vector<1x2xf32> to vector<8x2xf32>
    %9 = arith.mulf %7, %8 : vector<8x2xf32>
    %10 = arith.addf %4, %9 : vector<8x2xf32>
    %11 = vector.extract_strided_slice %0 {offsets = [0, 1], sizes = [8, 1], strides = [1, 1]} : vector<8x2xf32> to vector<8x1xf32>
    %12 = vector.extract_strided_slice %1 {offsets = [1, 0], sizes = [1, 2], strides = [1, 1]} : vector<2x2xf32> to vector<1x2xf32>
    %13 = vector.broadcast %11 : vector<8x1xf32> to vector<8x2xf32>
    %14 = vector.broadcast %12 : vector<1x2xf32> to vector<8x2xf32>
    %15 = arith.mulf %13, %14 : vector<8x2xf32>
    %16 = arith.addf %10, %15 : vector<8x2xf32>
    %c0_5 = arith.constant 0 : index
    %c0_6 = arith.constant 0 : index
    %17 = vector.load %arg3[%c0_5, %c0_6] : memref<8x2xf32, #tpu.memory_space<vmem>>, vector<8x2xf32>
    tpu.vector_store %arg3[%c0_5, %c0_6], %16 {strides = array<i32>} : memref<8x2xf32, #tpu.memory_space<vmem>>, vector<8x2xf32>,
    return
  }
}

</mosaic_0001>

<llo_original>
// kernel: linear_pallas.1
$region0: #{linear_pallas.1}
  #allocation0 [shape = 'u32[]', space=smem, size = 0x4, offset = 0x4, fixed_abs, tag = 'smem constant byte address 0x4 - core index']
  #allocation1 [shape = 'u32[144,128]{1,0:T(1,128)}', space=vmem, size = 0x12000, scoped, tag = 'internal scratch']
  %s0 = inlined_call_operand.vmem [shape: f32[8,2], index: 0, kind: input, shape index: {}]
  %s1 = inlined_call_operand.vmem [shape: f32[2,2], index: 1, kind: input, shape index: {}]
  %s2 = inlined_call_operand.vmem [shape: f32[1,2], index: 2, kind: input, shape index: {}]
  %s3 = inlined_call_operand.vmem [shape: f32[8,2], index: 3, kind: output, shape index: {}]
  %s4 = sld [smem:[#allocation0]]
  $region22: #{linear_pallas.1} parent=0
    _
  %s6 = ssub.s32 1, %s4
  %s7 = scalar_select 0, %s6, %s4
  // Predicated region
  $region2: #{linear_pallas.1} parent=0 // pred_check
    _
  $region3: #{linear_pallas.1} parent=0 // pred_check_branch
    %9 = sbr.rel (0) target = $region5
  $region4: #{linear_pallas.1} parent=0 // pred_region
    _
  $region5: #{linear_pallas.1} parent=0 // pred_fallthru
    _
  // Predicated region
  $region6: #{linear_pallas.1} parent=0 // pred_check
    _
  $region7: #{linear_pallas.1} parent=0 // pred_check_branch
    %11 = sbr.rel (0) target = $region9
  $region8: #{linear_pallas.1} parent=0 // pred_region
    _
  $region9: #{linear_pallas.1} parent=0 // pred_fallthru
    _
  // Predicated region
  $region10: #{linear_pallas.1} parent=0 // pred_check
    _
  $region11: #{linear_pallas.1} parent=0 // pred_check_branch
    %13 = sbr.rel (0) target = $region13
  $region12: #{linear_pallas.1} parent=0 // pred_region
    _
  $region13: #{linear_pallas.1} parent=0 // pred_fallthru
    _
  %v14 = vld [vmem:[%s0] sm:$0xff]
  %v15 = vld [vmem:[%s1] sm:$0x3]
  %v16 = vld [vmem:[%s2] sm:$0x1]
  %v18 = vlaneseq
  %v19 = vshrl.u32 %v18, 7
  %v20 = vsub.s32 0, %v19
  %v21 = vrot.slane %v16, %v20
  %24 = vset.pattern.permute.xlu0 0
  %25 = vperm.xlu0 %24, %v14
  %v26 = vpop.permute.xlu0 %25
  %v28 = vlaneseq
  %v29 = vshrl.u32 %v28, 7
  %v30 = vsub.s32 0, %v29
  %v31 = vrot.slane %v15, %v30
  %v32 = vmul.f32 %v26, %v31
  %v33 = vadd.f32 %v21, %v32
  %34 = vset.pattern.permute.xlu0 1
  %35 = vperm.xlu0 %34, %v14
  %v36 = vpop.permute.xlu0 %35
  %v38 = vlaneseq
  %v39 = vshrl.u32 %v38, 7
  %v40 = vsub.s32 1, %v39
  %v41 = vrot.slane %v15, %v40
  %v42 = vmul.f32 %v36, %v41
  %v43 = vadd.f32 %v33, %v42
  %vm44 = vcmask 15360
  %45 = vst.msk [vmem:[%s3] sm:$0xff] %vm44, %v43
  // Predicated region
  $region14: #{linear_pallas.1} parent=0 // pred_check
    _
  $region15: #{linear_pallas.1} parent=0 // pred_check_branch
    %47 = sbr.rel (0) target = $region17
  $region16: #{linear_pallas.1} parent=0 // pred_region
    _
  $region17: #{linear_pallas.1} parent=0 // pred_fallthru
    _
  // Predicated region
  $region18: #{linear_pallas.1} parent=0 // pred_check
    _
  $region19: #{linear_pallas.1} parent=0 // pred_check_branch
    %49 = sbr.rel (0) target = $region21
  $region20: #{linear_pallas.1} parent=0 // pred_region
    _
  $region21: #{linear_pallas.1} parent=0 // pred_fallthru
    _

</llo_original>
